<compile_context>
chip_gen: v5e
topology: v5e:2x2
jax: 0.10.0
libtpu: 0.0.40
codegen_flags: <defaults>
</compile_context>

<pallas_src>
import jax
import jax.numpy as jnp
from jax.experimental import pallas as pl
from jax.experimental.pallas import tpu as pltpu


def _round_up(n: int, m: int) -> int:
    return ((n + m - 1) // m) * m


def cls_head_kernel(x_ref, seg_ref, w_ref, b_ref, o_ref):
    # x_ref:   [TB, F*D]  lane-dense flattened input tile
    # seg_ref: [F*D, F]   block-diagonal ones (segment-sum matrix), pinned
    # w_ref:   [F, Npad]  linear weight, pre-transposed and lane-padded, pinned
    # b_ref:   [1, Npad]  bias, lane-padded, pinned
    # o_ref:   [TB, Npad]
    x = x_ref[...].astype(jnp.float32)
    isnan = jnp.isnan(x)
    xm = jnp.where(isnan, 0.0, x)
    valid = (~isnan).astype(jnp.float32)

    seg = seg_ref[...]
    # nanmean via MXU segment sums: per-feature numerator and non-NaN counts.
    s = jnp.dot(xm, seg, preferred_element_type=jnp.float32)       # [TB, F]
    cnt = jnp.dot(valid, seg, preferred_element_type=jnp.float32)  # [TB, F]
    feat = s / cnt  # all-NaN run -> 0/0 = NaN, matching torch.nanmean

    # Dropout is identity at inference; Linear: feat @ W^T + b.
    y = jnp.dot(feat, w_ref[...], preferred_element_type=jnp.float32) + b_ref[...]
    o_ref[...] = y.astype(o_ref.dtype)


def classification_head_forward(x, w, b, *, max_batch_tile=512,
                                x_tile_vmem_budget=8 * 1024 * 1024):
    """x: [B, C, P, D]; w: [n_classes, C*P] (PyTorch Linear layout); b: [n_classes]."""
    B, C, P, D = x.shape
    F = C * P
    FD = F * D
    n_classes = w.shape[0]

    # Lane-dense layout: each feature's D-length nanmean run is contiguous lanes.
    xf = x.reshape(B, FD)

    # Batch tile: multiple of 8 sublanes, capped so the double-buffered x tile
    # stays inside a modest VMEM budget on every generation (v5e/v6e/v7x).
    bytes_per_row = FD * x.dtype.itemsize
    tb_cap = max(8, (x_tile_vmem_budget // (2 * bytes_per_row)) // 8 * 8)
    TB = min(max_batch_tile, tb_cap, _round_up(B, 8))
    B_pad = _round_up(B, TB)
    if B_pad != B:
        # Zero (non-NaN) pad rows -> cnt = D, feat = 0; sliced off below anyway.
        xf = jnp.concatenate([xf, jnp.zeros((B_pad - B, FD), xf.dtype)], axis=0)

    # Pad n_classes to 128 lanes for unmasked lane-dense stores / aligned MXU N.
    N_pad = _round_up(max(n_classes, 128), 128)
    w_t = jnp.zeros((F, N_pad), jnp.float32).at[:, :n_classes].set(
        w.T.astype(jnp.float32))
    b_p = jnp.zeros((1, N_pad), jnp.float32).at[0, :n_classes].set(
        b.astype(jnp.float32))

    # Block-diagonal segment-sum matrix: seg[k, f] = 1 iff k // D == f.
    # TODO(synk): seg is O(F^2 * D); fine for this head size (F*D = 1024 here),
    # a feature-tiled reduction would be needed for very large d_model heads.
    seg = (jnp.arange(FD, dtype=jnp.int32)[:, None] // D
           == jnp.arange(F, dtype=jnp.int32)[None, :]).astype(jnp.float32)

    out = pl.pallas_call(
        cls_head_kernel,
        out_shape=jax.ShapeDtypeStruct((B_pad, N_pad), x.dtype),
        grid=(B_pad // TB,),
        in_specs=[
            pl.BlockSpec((TB, FD), lambda i: (i, 0)),     # tiled over batch
            pl.BlockSpec((FD, F), lambda i: (0, 0)),      # pinned
            pl.BlockSpec((F, N_pad), lambda i: (0, 0)),   # pinned
            pl.BlockSpec((1, N_pad), lambda i: (0, 0)),   # pinned
        ],
        out_specs=pl.BlockSpec((TB, N_pad), lambda i: (i, 0)),
        compiler_params=pltpu.CompilerParams(
            dimension_semantics=("parallel",),            # megacore over batch
            vmem_limit_bytes=32 * 1024 * 1024,
        ),
    )(xf, seg, w_t, b_p)

    # TODO(synk): PyTorch's .squeeze() drops the batch dim when B == 1; we always
    # return [B, n_classes].  Training-mode dropout is not implemented.
    return out[:B, :n_classes]


def reference_forward(x, w, b):
    # Pure-JAX reference mirroring the PyTorch module (inference mode).
    feat = jnp.nanmean(x, axis=-1)                # [B, C, P]
    feat = feat.reshape(feat.shape[0], -1)        # flatten(start_dim=1)
    return feat @ w.T + b


if __name__ == "__main__":
    # Module config: n_channels=4, d_model=16 (== n_patches, as the module's
    # Linear layout requires), n_classes=3.
    # Input x: [batch=2, n_channels=4, n_patches=16, d_model=16].
    B, C, P, D = 2, 4, 16, 16
    n_classes = 3
    in_features = C * P  # == n_channels * d_model

    key = jax.random.PRNGKey(0)
    kx, kn, kw, kb = jax.random.split(key, 4)

    x = jax.random.normal(kx, (B, C, P, D), dtype=jnp.float32)
    # Sprinkle some NaNs so nanmean is actually exercised (no all-NaN rows).
    nan_mask = jax.random.uniform(kn, (B, C, P, D)) < 0.05
    x = jnp.where(nan_mask, jnp.nan, x)

    # Deterministic Linear params (PyTorch-style uniform(-1/sqrt(fan_in), 1/sqrt(fan_in))).
    bound = 1.0 / (in_features ** 0.5)
    w = jax.random.uniform(kw, (n_classes, in_features), jnp.float32, -bound, bound)
    b = jax.random.uniform(kb, (n_classes,), jnp.float32, -bound, bound)

    y = classification_head_forward(x, w, b)
    y = jax.block_until_ready(y)

    y_ref = reference_forward(x, w, b)
    assert y.shape == (B, n_classes), y.shape
    assert jnp.allclose(y, y_ref, atol=1e-5, rtol=1e-5), (y, y_ref)

    print("KERNEL_OK")
</pallas_src>

<mosaic_0001>
module attributes {stable_mosaic.version = 11 : i64} {
  func.func @cls_head_kernel(%arg0: i32, %arg1: memref<8x1024xf32, #tpu.memory_space<vmem>>, %arg2: memref<1024x64xf32, #tpu.memory_space<vmem>>, %arg3: memref<64x128xf32, #tpu.memory_space<vmem>>, %arg4: memref<1x128xf32, #tpu.memory_space<vmem>>, %arg5: memref<8x128xf32, #tpu.memory_space<vmem>>) attributes {dimension_semantics = [#tpu.dimension_semantics<parallel>], iteration_bounds = array<i64: 1>, scalar_prefetch = 0 : i64, scratch_operands = 0 : i64, tpu.core_type = #tpu.core_type<tc>, window_params = [{transform_indices = @transform_0, window_bounds = array<i64: 8, 1024>}, {pipeline_mode = #tpu.pipeline_mode<synchronous>, transform_indices = @transform_1, window_bounds = array<i64: 1024, 64>}, {pipeline_mode = #tpu.pipeline_mode<synchronous>, transform_indices = @transform_2, window_bounds = array<i64: 64, 128>}, {pipeline_mode = #tpu.pipeline_mode<synchronous>, transform_indices = @transform_3, window_bounds = array<i64: 1, 128>}, {transform_indices = @transform_4, window_bounds = array<i64: 8, 128>}]} {
    %c0 = arith.constant 0 : index
    %c0_0 = arith.constant 0 : index
    %0 = vector.load %arg1[%c0, %c0_0] : memref<8x1024xf32, #tpu.memory_space<vmem>>, vector<8x1024xf32>
    %1 = arith.cmpf one, %0, %0 : vector<8x1024xf32>
    %cst = arith.constant 0.000000e+00 : f32
    %2 = vector.broadcast %cst : f32 to vector<8x1024xf32>
    %3 = arith.select %1, %2, %0 : vector<8x1024xi1>, vector<8x1024xf32>
    %cst_1 = arith.constant dense<true> : vector<8x1024xi1>
    %4 = arith.xori %1, %cst_1 : vector<8x1024xi1>
    %5 = arith.extui %4 : vector<8x1024xi1> to vector<8x1024xi32>
    %6 = arith.sitofp %5 : vector<8x1024xi32> to vector<8x1024xf32>
    %c0_2 = arith.constant 0 : index
    %c0_3 = arith.constant 0 : index
    %7 = vector.load %arg2[%c0_2, %c0_3] : memref<1024x64xf32, #tpu.memory_space<vmem>>, vector<1024x64xf32>
    %cst_4 = arith.constant dense<0.000000e+00> : vector<8x64xf32>
    %8 = tpu.matmul %3, %7, %cst_4 {dimension_numbers = #tpu.dot_dimension_numbers<[1], [0], [0], [1], [0, 0, 1, 1], [], []>} : vector<8x1024xf32>, vector<1024x64xf32>, vector<8x64xf32> -> vector<8x64xf32>
    %cst_5 = arith.constant dense<0.000000e+00> : vector<8x64xf32>
    %9 = tpu.matmul %6, %7, %cst_5 {dimension_numbers = #tpu.dot_dimension_numbers<[1], [0], [0], [1], [0, 0, 1, 1], [], []>} : vector<8x1024xf32>, vector<1024x64xf32>, vector<8x64xf32> -> vector<8x64xf32>
    %10 = arith.divf %8, %9 : vector<8x64xf32>
    %c0_6 = arith.constant 0 : index
    %c0_7 = arith.constant 0 : index
    %11 = vector.load %arg3[%c0_6, %c0_7] : memref<64x128xf32, #tpu.memory_space<vmem>>, vector<64x128xf32>
    %cst_8 = arith.constant dense<0.000000e+00> : vector<8x128xf32>
    %12 = tpu.matmul %10, %11, %cst_8 {dimension_numbers = #tpu.dot_dimension_numbers<[1], [0], [0], [1], [0, 0, 1, 1], [], []>} : vector<8x64xf32>, vector<64x128xf32>, vector<8x128xf32> -> vector<8x128xf32>
    %c0_9 = arith.constant 0 : index
    %c0_10 = arith.constant 0 : index
    %13 = vector.load %arg4[%c0_9, %c0_10] : memref<1x128xf32, #tpu.memory_space<vmem>>, vector<1x128xf32>
    %14 = vector.broadcast %13 : vector<1x128xf32> to vector<8x128xf32>
    %15 = arith.addf %12, %14 : vector<8x128xf32>
    %c0_11 = arith.constant 0 : index
    %c0_12 = arith.constant 0 : index
    %16 = vector.load %arg5[%c0_11, %c0_12] : memref<8x128xf32, #tpu.memory_space<vmem>>, vector<8x128xf32>
    tpu.vector_store %arg5[%c0_11, %c0_12], %15 {strides = array<i32>} : memref<8x128xf32, #tpu.memory_space<vmem>>, vector<8x128xf32>,
    return
  }
  func.func @transform_0(%arg0: i32) -> (i32, i32) {
    %c0_i32 = arith.constant 0 : i32
    %c0_i32_0 = arith.constant 0 : i32
    return %arg0, %c0_i32 : i32, i32
  }
  func.func @transform_1(%arg0: i32) -> (i32, i32) {
    %c0_i32 = arith.constant 0 : i32
    %c0_i32_0 = arith.constant 0 : i32
    %c0_i32_1 = arith.constant 0 : i32
    return %c0_i32, %c0_i32_0 : i32, i32
  }
  func.func @transform_2(%arg0: i32) -> (i32, i32) {
    %c0_i32 = arith.constant 0 : i32
    %c0_i32_0 = arith.constant 0 : i32
    %c0_i32_1 = arith.constant 0 : i32
    return %c0_i32, %c0_i32_0 : i32, i32
  }
  func.func @transform_3(%arg0: i32) -> (i32, i32) {
    %c0_i32 = arith.constant 0 : i32
    %c0_i32_0 = arith.constant 0 : i32
    %c0_i32_1 = arith.constant 0 : i32
    return %c0_i32, %c0_i32_0 : i32, i32
  }
  func.func @transform_4(%arg0: i32) -> (i32, i32) {
    %c0_i32 = arith.constant 0 : i32
    %c0_i32_0 = arith.constant 0 : i32
    return %arg0, %c0_i32 : i32, i32
  }
}

</mosaic_0001>

<llo_original>
// kernel: tpu_custom_call.1
$region0: #{tpu_custom_call.1}
  #allocation0 [shape = 'u32[]', space=smem, size = 0x4, offset = 0x4, fixed_abs, tag = 'smem constant byte address 0x4 - core index']
  #allocation1 [shape = 'u32[72,128]{1,0:T(1,128)}', space=vmem, size = 0x9000, scoped, tag = 'internal scratch']
  %s0 = inlined_call_operand.vmem [shape: f32[8,1024], index: 0, kind: input, shape index: {}]
  %s1 = inlined_call_operand.vmem [shape: f32[1024,64], index: 1, kind: input, shape index: {}]
  %s2 = inlined_call_operand.vmem [shape: f32[64,128], index: 2, kind: input, shape index: {}]
  %s3 = inlined_call_operand.vmem [shape: f32[1,128], index: 3, kind: input, shape index: {}]
  %s4 = inlined_call_operand.hbm [shape: f32[8,128], index: 4, kind: output, shape index: {}]
  %s5 = sld [smem:[#allocation0]]
  $region26: #{tpu_custom_call.1} parent=0
    _
  %s7 = ssub.s32 1, %s5
  %s8 = scalar_select 0, %s7, %s5
  $region1: #{tpu_custom_call.1} parent=0
    #allocation2 [shape = 'u8[4096]{0}', space=vmem, size = 0x1000, scoped, tag = 'output window, operand 0, single buffered']
    #allocation3 [shape = 's32[1]{0}', space=sflag, size = 0x4, scoped, tag = 'scoped memory for tpu_custom_call.1']
    %9 = vsyncpa [#allocation3], 0
    // Predicated region
    $region2: #{tpu_custom_call.1} parent=1 // pred_check
      _
    $region3: #{tpu_custom_call.1} parent=1 // pred_check_branch
      %11 = sbr.rel (0) target = $region5
    $region4: #{tpu_custom_call.1} parent=1 // pred_region
      _
    $region5: #{tpu_custom_call.1} parent=1 // pred_fallthru
      _
    // Predicated region
    $region6: #{tpu_custom_call.1} parent=1 // pred_check
      _
    $region7: #{tpu_custom_call.1} parent=1 // pred_check_branch
      %13 = sbr.rel (0) target = $region9
    $region8: #{tpu_custom_call.1} parent=1 // pred_region
      _
    $region9: #{tpu_custom_call.1} parent=1 // pred_fallthru
      _
    // Predicated region
    $region10: #{tpu_custom_call.1} parent=1 // pred_check
      _
    $region11: #{tpu_custom_call.1} parent=1 // pred_check_branch
      %15 = sbr.rel (0) target = $region13
    $region12: #{tpu_custom_call.1} parent=1 // pred_region
      _
    $region13: #{tpu_custom_call.1} parent=1 // pred_fallthru
      _
    // Predicated region
    $region14: #{tpu_custom_call.1} parent=1 // pred_check
      _
    $region15: #{tpu_custom_call.1} parent=1 // pred_check_branch
      %17 = sbr.rel (0) target = $region17
    $region16: #{tpu_custom_call.1} parent=1 // pred_region
      _
    $region17: #{tpu_custom_call.1} parent=1 // pred_fallthru
      _
    %v18 = vld [vmem:[%s0] sm:$0xff]
    %v19 = vld [vmem:[%s0 + $0x8] sm:$0xff]
    %v20 = vld [vmem:[%s0 + $0x10] sm:$0xff]
    %v21 = vld [vmem:[%s0 + $0x18] sm:$0xff]
    %v22 = vld [vmem:[%s0 + $0x20] sm:$0xff]
    %v23 = vld [vmem:[%s0 + $0x28] sm:$0xff]
    %v24 = vld [vmem:[%s0 + $0x30] sm:$0xff]
    %v25 = vld [vmem:[%s0 + $0x38] sm:$0xff]
    %vm26 = vcmp.ne.f32.partialorder %v18, %v18
    %vm27 = vcmp.ne.f32.partialorder %v19, %v19
    %vm28 = vcmp.ne.f32.partialorder %v20, %v20
    %vm29 = vcmp.ne.f32.partialorder %v21, %v21
    %vm30 = vcmp.ne.f32.partialorder %v22, %v22
    %vm31 = vcmp.ne.f32.partialorder %v23, %v23
    %vm32 = vcmp.ne.f32.partialorder %v24, %v24
    %vm33 = vcmp.ne.f32.partialorder %v25, %v25
    %v34 = vsel %vm26, 0.0, %v18
    %v35 = vsel %vm27, 0.0, %v19
    %v36 = vsel %vm28, 0.0, %v20
    %v37 = vsel %vm29, 0.0, %v21
    %v38 = vsel %vm30, 0.0, %v22
    %v39 = vsel %vm31, 0.0, %v23
    %v40 = vsel %vm32, 0.0, %v24
    %v41 = vsel %vm33, 0.0, %v25
    %vm42 = vmxor %vm26, 1
    %vm43 = vmxor %vm27, 1
    %vm44 = vmxor %vm28, 1
    %vm45 = vmxor %vm29, 1
    %vm46 = vmxor %vm30, 1
    %vm47 = vmxor %vm31, 1
    %vm48 = vmxor %vm32, 1
    %vm49 = vmxor %vm33, 1
    %v50 = vsel %vm42, 1, 0
    %v51 = vsel %vm43, 1, 0
    %v52 = vsel %vm44, 1, 0
    %v53 = vsel %vm45, 1, 0
    %v54 = vsel %vm46, 1, 0
    %v55 = vsel %vm47, 1, 0
    %v56 = vsel %vm48, 1, 0
    %v57 = vsel %vm49, 1, 0
    %v58 = vcvt.s32.f32 %v50
    %v59 = vcvt.s32.f32 %v51
    %v60 = vcvt.s32.f32 %v52
    %v61 = vcvt.s32.f32 %v53
    %v62 = vcvt.s32.f32 %v54
    %v63 = vcvt.s32.f32 %v55
    %v64 = vcvt.s32.f32 %v56
    %v65 = vcvt.s32.f32 %v57
    %v66 = vld [vmem:[%s1] sm:$0xff]
    %v67 = vld [vmem:[%s1 + $0x8] sm:$0xff]
    %v68 = vld [vmem:[%s1 + $0x10] sm:$0xff]
    %v69 = vld [vmem:[%s1 + $0x18] sm:$0xff]
    %v70 = vld [vmem:[%s1 + $0x20] sm:$0xff]
    %v71 = vld [vmem:[%s1 + $0x28] sm:$0xff]
    %v72 = vld [vmem:[%s1 + $0x30] sm:$0xff]
    %v73 = vld [vmem:[%s1 + $0x38] sm:$0xff]
    %v74 = vld [vmem:[%s1 + $0x40] sm:$0xff]
    %v75 = vld [vmem:[%s1 + $0x48] sm:$0xff]
    %v76 = vld [vmem:[%s1 + $0x50] sm:$0xff]
    %v77 = vld [vmem:[%s1 + $0x58] sm:$0xff]
    %v78 = vld [vmem:[%s1 + $0x60] sm:$0xff]
    %v79 = vld [vmem:[%s1 + $0x68] sm:$0xff]
    %v80 = vld [vmem:[%s1 + $0x70] sm:$0xff]
    %v81 = vld [vmem:[%s1 + $0x78] sm:$0xff]
    %v82 = vld [vmem:[%s1 + $0x80] sm:$0xff]
    %v83 = vld [vmem:[%s1 + $0x88] sm:$0xff]
    %v84 = vld [vmem:[%s1 + $0x90] sm:$0xff]
    %v85 = vld [vmem:[%s1 + $0x98] sm:$0xff]
    %v86 = vld [vmem:[%s1 + $0xa0] sm:$0xff]
    %v87 = vld [vmem:[%s1 + $0xa8] sm:$0xff]
    %v88 = vld [vmem:[%s1 + $0xb0] sm:$0xff]
    %v89 = vld [vmem:[%s1 + $0xb8] sm:$0xff]
    %v90 = vld [vmem:[%s1 + $0xc0] sm:$0xff]
    %v91 = vld [vmem:[%s1 + $0xc8] sm:$0xff]
    %v92 = vld [vmem:[%s1 + $0xd0] sm:$0xff]
    %v93 = vld [vmem:[%s1 + $0xd8] sm:$0xff]
    %v94 = vld [vmem:[%s1 + $0xe0] sm:$0xff]
    %v95 = vld [vmem:[%s1 + $0xe8] sm:$0xff]
    %v96 = vld [vmem:[%s1 + $0xf0] sm:$0xff]
    %v97 = vld [vmem:[%s1 + $0xf8] sm:$0xff]
    %v98 = vld [vmem:[%s1 + $0x100] sm:$0xff]
    %v99 = vld [vmem:[%s1 + $0x108] sm:$0xff]
    %v100 = vld [vmem:[%s1 + $0x110] sm:$0xff]
    %v101 = vld [vmem:[%s1 + $0x118] sm:$0xff]
    %v102 = vld [vmem:[%s1 + $0x120] sm:$0xff]
    %v103 = vld [vmem:[%s1 + $0x128] sm:$0xff]
    %v104 = vld [vmem:[%s1 + $0x130] sm:$0xff]
    %v105 = vld [vmem:[%s1 + $0x138] sm:$0xff]
    %v106 = vld [vmem:[%s1 + $0x140] sm:$0xff]
    %v107 = vld [vmem:[%s1 + $0x148] sm:$0xff]
    %v108 = vld [vmem:[%s1 + $0x150] sm:$0xff]
    %v109 = vld [vmem:[%s1 + $0x158] sm:$0xff]
    %v110 = vld [vmem:[%s1 + $0x160] sm:$0xff]
    %v111 = vld [vmem:[%s1 + $0x168] sm:$0xff]
    %v112 = vld [vmem:[%s1 + $0x170] sm:$0xff]
    %v113 = vld [vmem:[%s1 + $0x178] sm:$0xff]
    %v114 = vld [vmem:[%s1 + $0x180] sm:$0xff]
    %v115 = vld [vmem:[%s1 + $0x188] sm:$0xff]
    %v116 = vld [vmem:[%s1 + $0x190] sm:$0xff]
    %v117 = vld [vmem:[%s1 + $0x198] sm:$0xff]
    %v118 = vld [vmem:[%s1 + $0x1a0] sm:$0xff]
    %v119 = vld [vmem:[%s1 + $0x1a8] sm:$0xff]
    %v120 = vld [vmem:[%s1 + $0x1b0] sm:$0xff]
    %v121 = vld [vmem:[%s1 + $0x1b8] sm:$0xff]
    %v122 = vld [vmem:[%s1 + $0x1c0] sm:$0xff]
    %v123 = vld [vmem:[%s1 + $0x1c8] sm:$0xff]
    %v124 = vld [vmem:[%s1 + $0x1d0] sm:$0xff]
    %v125 = vld [vmem:[%s1 + $0x1d8] sm:$0xff]
    %v126 = vld [vmem:[%s1 + $0x1e0] sm:$0xff]
    %v127 = vld [vmem:[%s1 + $0x1e8] sm:$0xff]
    %v128 = vld [vmem:[%s1 + $0x1f0] sm:$0xff]
    %v129 = vld [vmem:[%s1 + $0x1f8] sm:$0xff]
    %v130 = vld [vmem:[%s1 + $0x200] sm:$0xff]
    %v131 = vld [vmem:[%s1 + $0x208] sm:$0xff]
    %v132 = vld [vmem:[%s1 + $0x210] sm:$0xff]
    %v133 = vld [vmem:[%s1 + $0x218] sm:$0xff]
    %v134 = vld [vmem:[%s1 + $0x220] sm:$0xff]
    %v135 = vld [vmem:[%s1 + $0x228] sm:$0xff]
    %v136 = vld [vmem:[%s1 + $0x230] sm:$0xff]
    %v137 = vld [vmem:[%s1 + $0x238] sm:$0xff]
    %v138 = vld [vmem:[%s1 + $0x240] sm:$0xff]
    %v139 = vld [vmem:[%s1 + $0x248] sm:$0xff]
    %v140 = vld [vmem:[%s1 + $0x250] sm:$0xff]
    %v141 = vld [vmem:[%s1 + $0x258] sm:$0xff]
    %v142 = vld [vmem:[%s1 + $0x260] sm:$0xff]
    %v143 = vld [vmem:[%s1 + $0x268] sm:$0xff]
    %v144 = vld [vmem:[%s1 + $0x270] sm:$0xff]
    %v145 = vld [vmem:[%s1 + $0x278] sm:$0xff]
    %v146 = vld [vmem:[%s1 + $0x280] sm:$0xff]
    %v147 = vld [vmem:[%s1 + $0x288] sm:$0xff]
    %v148 = vld [vmem:[%s1 + $0x290] sm:$0xff]
    %v149 = vld [vmem:[%s1 + $0x298] sm:$0xff]
    %v150 = vld [vmem:[%s1 + $0x2a0] sm:$0xff]
    %v151 = vld [vmem:[%s1 + $0x2a8] sm:$0xff]
    %v152 = vld [vmem:[%s1 + $0x2b0] sm:$0xff]
    %v153 = vld [vmem:[%s1 + $0x2b8] sm:$0xff]
    %v154 = vld [vmem:[%s1 + $0x2c0] sm:$0xff]
    %v155 = vld [vmem:[%s1 + $0x2c8] sm:$0xff]
    %v156 = vld [vmem:[%s1 + $0x2d0] sm:$0xff]
    %v157 = vld [vmem:[%s1 + $0x2d8] sm:$0xff]
    %v158 = vld [vmem:[%s1 + $0x2e0] sm:$0xff]
    %v159 = vld [vmem:[%s1 + $0x2e8] sm:$0xff]
    %v160 = vld [vmem:[%s1 + $0x2f0] sm:$0xff]
    %v161 = vld [vmem:[%s1 + $0x2f8] sm:$0xff]
    %v162 = vld [vmem:[%s1 + $0x300] sm:$0xff]
    %v163 = vld [vmem:[%s1 + $0x308] sm:$0xff]
    %v164 = vld [vmem:[%s1 + $0x310] sm:$0xff]
    %v165 = vld [vmem:[%s1 + $0x318] sm:$0xff]
    %v166 = vld [vmem:[%s1 + $0x320] sm:$0xff]
    %v167 = vld [vmem:[%s1 + $0x328] sm:$0xff]
    %v168 = vld [vmem:[%s1 + $0x330] sm:$0xff]
    %v169 = vld [vmem:[%s1 + $0x338] sm:$0xff]
    %v170 = vld [vmem:[%s1 + $0x340] sm:$0xff]
    %v171 = vld [vmem:[%s1 + $0x348] sm:$0xff]
    %v172 = vld [vmem:[%s1 + $0x350] sm:$0xff]
    %v173 = vld [vmem:[%s1 + $0x358] sm:$0xff]
    %v174 = vld [vmem:[%s1 + $0x360] sm:$0xff]
    %v175 = vld [vmem:[%s1 + $0x368] sm:$0xff]
    %v176 = vld [vmem:[%s1 + $0x370] sm:$0xff]
    %v177 = vld [vmem:[%s1 + $0x378] sm:$0xff]
    %v178 = vld [vmem:[%s1 + $0x380] sm:$0xff]
    %v179 = vld [vmem:[%s1 + $0x388] sm:$0xff]
    %v180 = vld [vmem:[%s1 + $0x390] sm:$0xff]
    %v181 = vld [vmem:[%s1 + $0x398] sm:$0xff]
    %v182 = vld [vmem:[%s1 + $0x3a0] sm:$0xff]
    %v183 = vld [vmem:[%s1 + $0x3a8] sm:$0xff]
    %v184 = vld [vmem:[%s1 + $0x3b0] sm:$0xff]
    %v185 = vld [vmem:[%s1 + $0x3b8] sm:$0xff]
    %v186 = vld [vmem:[%s1 + $0x3c0] sm:$0xff]
    %v187 = vld [vmem:[%s1 + $0x3c8] sm:$0xff]
    %v188 = vld [vmem:[%s1 + $0x3d0] sm:$0xff]
    %v189 = vld [vmem:[%s1 + $0x3d8] sm:$0xff]
    %v190 = vld [vmem:[%s1 + $0x3e0] sm:$0xff]
    %v191 = vld [vmem:[%s1 + $0x3e8] sm:$0xff]
    %v192 = vld [vmem:[%s1 + $0x3f0] sm:$0xff]
    %v193 = vld [vmem:[%s1 + $0x3f8] sm:$0xff]
    %194 = vmatpush.msra.mxu0 %v81
    %195 = vmatpush.msra.mxu0 %v80
    %196 = vmatpush.msra.mxu0 %v79
    %197 = vmatpush.msra.mxu0 %v78
    %198 = vmatpush.msra.mxu0 %v77
    %199 = vmatpush.msra.mxu0 %v76
    %200 = vmatpush.msra.mxu0 %v75
    %201 = vmatpush.msra.mxu0 %v74
    %202 = vmatpush.msra.mxu0 %v73
    %203 = vmatpush.msra.mxu0 %v72
    %204 = vmatpush.msra.mxu0 %v71
    %205 = vmatpush.msra.mxu0 %v70
    %206 = vmatpush.msra.mxu0 %v69
    %207 = vmatpush.msra.mxu0 %v68
    %208 = vmatpush.msra.mxu0 %v67
    %209 = vmatpush.msra.mxu0 %v66
    %210 = vmatmul.f32.gmra.mxu0 %v34
    %v211 = vpop.f32.mrf.mxu0
    %v212 = vadd.f32 0.0, %v211
    %213 = vdwg.mxu0
    %214 = vmatpush.msra.mxu0 %v97
    %215 = vmatpush.msra.mxu0 %v96
    %216 = vmatpush.msra.mxu0 %v95
    %217 = vmatpush.msra.mxu0 %v94
    %218 = vmatpush.msra.mxu0 %v93
    %219 = vmatpush.msra.mxu0 %v92
    %220 = vmatpush.msra.mxu0 %v91
    %221 = vmatpush.msra.mxu0 %v90
    %222 = vmatpush.msra.mxu0 %v89
    %223 = vmatpush.msra.mxu0 %v88
    %224 = vmatpush.msra.mxu0 %v87
    %225 = vmatpush.msra.mxu0 %v86
    %226 = vmatpush.msra.mxu0 %v85
    %227 = vmatpush.msra.mxu0 %v84
    %228 = vmatpush.msra.mxu0 %v83
    %229 = vmatpush.msra.mxu0 %v82
    %230 = vmatmul.f32.gmra.mxu0 %v35
    %v231 = vpop.f32.mrf.mxu0
    %v232 = vadd.f32 %v212, %v231
    %233 = vdwg.mxu0
    %234 = vmatpush.msra.mxu0 %v113
    %235 = vmatpush.msra.mxu0 %v112
    %236 = vmatpush.msra.mxu0 %v111
    %237 = vmatpush.msra.mxu0 %v110
    %238 = vmatpush.msra.mxu0 %v109
    %239 = vmatpush.msra.mxu0 %v108
    %240 = vmatpush.msra.mxu0 %v107
    %241 = vmatpush.msra.mxu0 %v106
    %242 = vmatpush.msra.mxu0 %v105
    %243 = vmatpush.msra.mxu0 %v104
    %244 = vmatpush.msra.mxu0 %v103
    %245 = vmatpush.msra.mxu0 %v102
    %246 = vmatpush.msra.mxu0 %v101
    %247 = vmatpush.msra.mxu0 %v100
    %248 = vmatpush.msra.mxu0 %v99
    %249 = vmatpush.msra.mxu0 %v98
    %250 = vmatmul.f32.gmra.mxu0 %v36
    %v251 = vpop.f32.mrf.mxu0
    %v252 = vadd.f32 %v232, %v251
    %253 = vdwg.mxu0
    %254 = vmatpush.msra.mxu0 %v129
    %255 = vmatpush.msra.mxu0 %v128
    %256 = vmatpush.msra.mxu0 %v127
    %257 = vmatpush.msra.mxu0 %v126
    %258 = vmatpush.msra.mxu0 %v125
    %259 = vmatpush.msra.mxu0 %v124
    %260 = vmatpush.msra.mxu0 %v123
    %261 = vmatpush.msra.mxu0 %v122
    %262 = vmatpush.msra.mxu0 %v121
    %263 = vmatpush.msra.mxu0 %v120
    %264 = vmatpush.msra.mxu0 %v119
    %265 = vmatpush.msra.mxu0 %v118
    %266 = vmatpush.msra.mxu0 %v117
    %267 = vmatpush.msra.mxu0 %v116
    %268 = vmatpush.msra.mxu0 %v115
    %269 = vmatpush.msra.mxu0 %v114
    %270 = vmatmul.f32.gmra.mxu0 %v37
    %v271 = vpop.f32.mrf.mxu0
    %v272 = vadd.f32 %v252, %v271
    %273 = vdwg.mxu0
    %274 = vmatpush.msra.mxu0 %v145
    %275 = vmatpush.msra.mxu0 %v144
    %276 = vmatpush.msra.mxu0 %v143
    %277 = vmatpush.msra.mxu0 %v142
    %278 = vmatpush.msra.mxu0 %v141
    %279 = vmatpush.msra.mxu0 %v140
    %280 = vmatpush.msra.mxu0 %v139
    %281 = vmatpush.msra.mxu0 %v138
    %282 = vmatpush.msra.mxu0 %v137
    %283 = vmatpush.msra.mxu0 %v136
    %284 = vmatpush.msra.mxu0 %v135
    %285 = vmatpush.msra.mxu0 %v134
    %286 = vmatpush.msra.mxu0 %v133
    %287 = vmatpush.msra.mxu0 %v132
    %288 = vmatpush.msra.mxu0 %v131
    %289 = vmatpush.msra.mxu0 %v130
    %290 = vmatmul.f32.gmra.mxu0 %v38
    %v291 = vpop.f32.mrf.mxu0
    %v292 = vadd.f32 %v272, %v291
    %293 = vdwg.mxu0
    %294 = vmatpush.msra.mxu0 %v161
    %295 = vmatpush.msra.mxu0 %v160
    %296 = vmatpush.msra.mxu0 %v159
    %297 = vmatpush.msra.mxu0 %v158
    %298 = vmatpush.msra.mxu0 %v157
    %299 = vmatpush.msra.mxu0 %v156
    %300 = vmatpush.msra.mxu0 %v155
    %301 = vmatpush.msra.mxu0 %v154
    %302 = vmatpush.msra.mxu0 %v153
    %303 = vmatpush.msra.mxu0 %v152
    %304 = vmatpush.msra.mxu0 %v151
    %305 = vmatpush.msra.mxu0 %v150
    %306 = vmatpush.msra.mxu0 %v149
    %307 = vmatpush.msra.mxu0 %v148
    %308 = vmatpush.msra.mxu0 %v147
    %309 = vmatpush.msra.mxu0 %v146
    %310 = vmatmul.f32.gmra.mxu0 %v39
    %v311 = vpop.f32.mrf.mxu0
    %v312 = vadd.f32 %v292, %v311
    %313 = vdwg.mxu0
    %314 = vmatpush.msra.mxu0 %v177
    %315 = vmatpush.msra.mxu0 %v176
    %316 = vmatpush.msra.mxu0 %v175
    %317 = vmatpush.msra.mxu0 %v174
    %318 = vmatpush.msra.mxu0 %v173
    %319 = vmatpush.msra.mxu0 %v172
    %320 = vmatpush.msra.mxu0 %v171
    %321 = vmatpush.msra.mxu0 %v170
    %322 = vmatpush.msra.mxu0 %v169
    %323 = vmatpush.msra.mxu0 %v168
    %324 = vmatpush.msra.mxu0 %v167
    %325 = vmatpush.msra.mxu0 %v166
    %326 = vmatpush.msra.mxu0 %v165
    %327 = vmatpush.msra.mxu0 %v164
    %328 = vmatpush.msra.mxu0 %v163
    %329 = vmatpush.msra.mxu0 %v162
    %330 = vmatmul.f32.gmra.mxu0 %v40
    %v331 = vpop.f32.mrf.mxu0
    %v332 = vadd.f32 %v312, %v331
    %333 = vdwg.mxu0
    %334 = vmatpush.msra.mxu0 %v193
    %335 = vmatpush.msra.mxu0 %v192
    %336 = vmatpush.msra.mxu0 %v191
    %337 = vmatpush.msra.mxu0 %v190
    %338 = vmatpush.msra.mxu0 %v189
    %339 = vmatpush.msra.mxu0 %v188
    %340 = vmatpush.msra.mxu0 %v187
    %341 = vmatpush.msra.mxu0 %v186
    %342 = vmatpush.msra.mxu0 %v185
    %343 = vmatpush.msra.mxu0 %v184
    %344 = vmatpush.msra.mxu0 %v183
    %345 = vmatpush.msra.mxu0 %v182
    %346 = vmatpush.msra.mxu0 %v181
    %347 = vmatpush.msra.mxu0 %v180
    %348 = vmatpush.msra.mxu0 %v179
    %349 = vmatpush.msra.mxu0 %v178
    %350 = vmatmul.f32.gmra.mxu0 %v41
    %v351 = vpop.f32.mrf.mxu0
    %v352 = vadd.f32 %v332, %v351
    %353 = vdwg.mxu0
    %354 = vmatpush.msra.mxu0 %v81
    %355 = vmatpush.msra.mxu0 %v80
    %356 = vmatpush.msra.mxu0 %v79
    %357 = vmatpush.msra.mxu0 %v78
    %358 = vmatpush.msra.mxu0 %v77
    %359 = vmatpush.msra.mxu0 %v76
    %360 = vmatpush.msra.mxu0 %v75
    %361 = vmatpush.msra.mxu0 %v74
    %362 = vmatpush.msra.mxu0 %v73
    %363 = vmatpush.msra.mxu0 %v72
    %364 = vmatpush.msra.mxu0 %v71
    %365 = vmatpush.msra.mxu0 %v70
    %366 = vmatpush.msra.mxu0 %v69
    %367 = vmatpush.msra.mxu0 %v68
    %368 = vmatpush.msra.mxu0 %v67
    %369 = vmatpush.msra.mxu0 %v66
    %370 = vmatmul.f32.gmra.mxu0 %v58
    %v371 = vpop.f32.mrf.mxu0
    %v372 = vadd.f32 0.0, %v371
    %373 = vdwg.mxu0
    %374 = vmatpush.msra.mxu0 %v97
    %375 = vmatpush.msra.mxu0 %v96
    %376 = vmatpush.msra.mxu0 %v95
    %377 = vmatpush.msra.mxu0 %v94
    %378 = vmatpush.msra.mxu0 %v93
    %379 = vmatpush.msra.mxu0 %v92
    %380 = vmatpush.msra.mxu0 %v91
    %381 = vmatpush.msra.mxu0 %v90
    %382 = vmatpush.msra.mxu0 %v89
    %383 = vmatpush.msra.mxu0 %v88
    %384 = vmatpush.msra.mxu0 %v87
    %385 = vmatpush.msra.mxu0 %v86
    %386 = vmatpush.msra.mxu0 %v85
    %387 = vmatpush.msra.mxu0 %v84
    %388 = vmatpush.msra.mxu0 %v83
    %389 = vmatpush.msra.mxu0 %v82
    %390 = vmatmul.f32.gmra.mxu0 %v59
    %v391 = vpop.f32.mrf.mxu0
    %v392 = vadd.f32 %v372, %v391
    %393 = vdwg.mxu0
    %394 = vmatpush.msra.mxu0 %v113
    %395 = vmatpush.msra.mxu0 %v112
    %396 = vmatpush.msra.mxu0 %v111
    %397 = vmatpush.msra.mxu0 %v110
    %398 = vmatpush.msra.mxu0 %v109
    %399 = vmatpush.msra.mxu0 %v108
    %400 = vmatpush.msra.mxu0 %v107
    %401 = vmatpush.msra.mxu0 %v106
    %402 = vmatpush.msra.mxu0 %v105
    %403 = vmatpush.msra.mxu0 %v104
    %404 = vmatpush.msra.mxu0 %v103
    %405 = vmatpush.msra.mxu0 %v102
    %406 = vmatpush.msra.mxu0 %v101
    %407 = vmatpush.msra.mxu0 %v100
    %408 = vmatpush.msra.mxu0 %v99
    %409 = vmatpush.msra.mxu0 %v98
    %410 = vmatmul.f32.gmra.mxu0 %v60
    %v411 = vpop.f32.mrf.mxu0
    %v412 = vadd.f32 %v392, %v411
    %413 = vdwg.mxu0
    %414 = vmatpush.msra.mxu0 %v129
    %415 = vmatpush.msra.mxu0 %v128
    %416 = vmatpush.msra.mxu0 %v127
    %417 = vmatpush.msra.mxu0 %v126
    %418 = vmatpush.msra.mxu0 %v125
    %419 = vmatpush.msra.mxu0 %v124
    %420 = vmatpush.msra.mxu0 %v123
    %421 = vmatpush.msra.mxu0 %v122
    %422 = vmatpush.msra.mxu0 %v121
    %423 = vmatpush.msra.mxu0 %v120
    %424 = vmatpush.msra.mxu0 %v119
    %425 = vmatpush.msra.mxu0 %v118
    %426 = vmatpush.msra.mxu0 %v117
    %427 = vmatpush.msra.mxu0 %v116
    %428 = vmatpush.msra.mxu0 %v115
    %429 = vmatpush.msra.mxu0 %v114
    %430 = vmatmul.f32.gmra.mxu0 %v61
    %v431 = vpop.f32.mrf.mxu0
    %v432 = vadd.f32 %v412, %v431
    %433 = vdwg.mxu0
    %434 = vmatpush.msra.mxu0 %v145
    %435 = vmatpush.msra.mxu0 %v144
    %436 = vmatpush.msra.mxu0 %v143
    %437 = vmatpush.msra.mxu0 %v142
    %438 = vmatpush.msra.mxu0 %v141
    %439 = vmatpush.msra.mxu0 %v140
    %440 = vmatpush.msra.mxu0 %v139
    %441 = vmatpush.msra.mxu0 %v138
    %442 = vmatpush.msra.mxu0 %v137
    %443 = vmatpush.msra.mxu0 %v136
    %444 = vmatpush.msra.mxu0 %v135
    %445 = vmatpush.msra.mxu0 %v134
    %446 = vmatpush.msra.mxu0 %v133
    %447 = vmatpush.msra.mxu0 %v132
    %448 = vmatpush.msra.mxu0 %v131
    %449 = vmatpush.msra.mxu0 %v130
    %450 = vmatmul.f32.gmra.mxu0 %v62
    %v451 = vpop.f32.mrf.mxu0
    %v452 = vadd.f32 %v432, %v451
    %453 = vdwg.mxu0
    %454 = vmatpush.msra.mxu0 %v161
    %455 = vmatpush.msra.mxu0 %v160
    %456 = vmatpush.msra.mxu0 %v159
    %457 = vmatpush.msra.mxu0 %v158
    %458 = vmatpush.msra.mxu0 %v157
    %459 = vmatpush.msra.mxu0 %v156
    %460 = vmatpush.msra.mxu0 %v155
    %461 = vmatpush.msra.mxu0 %v154
    %462 = vmatpush.msra.mxu0 %v153
    %463 = vmatpush.msra.mxu0 %v152
    %464 = vmatpush.msra.mxu0 %v151
    %465 = vmatpush.msra.mxu0 %v150
    %466 = vmatpush.msra.mxu0 %v149
    %467 = vmatpush.msra.mxu0 %v148
    %468 = vmatpush.msra.mxu0 %v147
    %469 = vmatpush.msra.mxu0 %v146
    %470 = vmatmul.f32.gmra.mxu0 %v63
    %v471 = vpop.f32.mrf.mxu0
    %v472 = vadd.f32 %v452, %v471
    %473 = vdwg.mxu0
    %474 = vmatpush.msra.mxu0 %v177
    %475 = vmatpush.msra.mxu0 %v176
    %476 = vmatpush.msra.mxu0 %v175
    %477 = vmatpush.msra.mxu0 %v174
    %478 = vmatpush.msra.mxu0 %v173
    %479 = vmatpush.msra.mxu0 %v172
    %480 = vmatpush.msra.mxu0 %v171
    %481 = vmatpush.msra.mxu0 %v170
    %482 = vmatpush.msra.mxu0 %v169
    %483 = vmatpush.msra.mxu0 %v168
    %484 = vmatpush.msra.mxu0 %v167
    %485 = vmatpush.msra.mxu0 %v166
    %486 = vmatpush.msra.mxu0 %v165
    %487 = vmatpush.msra.mxu0 %v164
    %488 = vmatpush.msra.mxu0 %v163
    %489 = vmatpush.msra.mxu0 %v162
    %490 = vmatmul.f32.gmra.mxu0 %v64
    %v491 = vpop.f32.mrf.mxu0
    %v492 = vadd.f32 %v472, %v491
    %493 = vdwg.mxu0
    %494 = vmatpush.msra.mxu0 %v193
    %495 = vmatpush.msra.mxu0 %v192
    %496 = vmatpush.msra.mxu0 %v191
    %497 = vmatpush.msra.mxu0 %v190
    %498 = vmatpush.msra.mxu0 %v189
    %499 = vmatpush.msra.mxu0 %v188
    %500 = vmatpush.msra.mxu0 %v187
    %501 = vmatpush.msra.mxu0 %v186
    %502 = vmatpush.msra.mxu0 %v185
    %503 = vmatpush.msra.mxu0 %v184
    %504 = vmatpush.msra.mxu0 %v183
    %505 = vmatpush.msra.mxu0 %v182
    %506 = vmatpush.msra.mxu0 %v181
    %507 = vmatpush.msra.mxu0 %v180
    %508 = vmatpush.msra.mxu0 %v179
    %509 = vmatpush.msra.mxu0 %v178
    %510 = vmatmul.f32.gmra.mxu0 %v65
    %v511 = vpop.f32.mrf.mxu0
    %v512 = vadd.f32 %v492, %v511
    %513 = vdwg.mxu0
    %v514 = vrcp.pop %v512
    %v515 = vmul.f32 %v512, %v514
    %v516 = vsub.f32 1.0, %v515
    %v517 = vmul.f32 %v514, %v516
    %v518 = vadd.f32 %v514, %v517
    %vm519 = vweird.f32 %v512
    %vm520 = vweird.f32 %v514
    %vm521 = vmor %vm519, %vm520
    %v522 = vsel %vm521, %v514, %v518
    %v523 = vand.u32 2147483647, %v512
    %vm524 = vcmp.eq.f32.partialorder %v523, 8.507059e+37
    %v525 = vand.u32 %v512, 2147483648
    %v526 = vor.u32 1.1754944e-38, %v525
    %v527 = vsel %vm524, %v526, %v522
    %v528 = vmul.f32 %v352, %v527
    %v529 = vld [vmem:[%s2] sm:$0xff]
    %v530 = vld [vmem:[%s2 + $0x8] sm:$0xff]
    %v531 = vld [vmem:[%s2 + $0x10] sm:$0xff]
    %v532 = vld [vmem:[%s2 + $0x18] sm:$0xff]
    %v533 = vld [vmem:[%s2 + $0x20] sm:$0xff]
    %v534 = vld [vmem:[%s2 + $0x28] sm:$0xff]
    %v535 = vld [vmem:[%s2 + $0x30] sm:$0xff]
    %v536 = vld [vmem:[%s2 + $0x38] sm:$0xff]
    %v537 = vld [vmem:[%s3] sm:$0x1]
    %v539 = vperm.slane %v537, 0
    %vm541 = vcmask 523264
    %v543 = vsel %vm541, %v528, 0
    %545 = vmatpush.msra.mxu0 0.0
    %546 = vmatpush.msra.mxu0 0.0
    %547 = vmatpush.msra.mxu0 0.0
    %548 = vmatpush.msra.mxu0 0.0
    %549 = vmatpush.msra.mxu0 0.0
    %550 = vmatpush.msra.mxu0 0.0
    %551 = vmatpush.msra.mxu0 0.0
    %552 = vmatpush.msra.mxu0 0.0
    %553 = vmatpush.msra.mxu0 %v536
    %554 = vmatpush.msra.mxu0 %v535
    %555 = vmatpush.msra.mxu0 %v534
    %556 = vmatpush.msra.mxu0 %v533
    %557 = vmatpush.msra.mxu0 %v532
    %558 = vmatpush.msra.mxu0 %v531
    %559 = vmatpush.msra.mxu0 %v530
    %560 = vmatpush.msra.mxu0 %v529
    %561 = vmatmul.f32.gmra.mxu0 %v543
    %v562 = vpop.f32.mrf.mxu0
    %v563 = vadd.f32 %v539, %v562
    %564 = vdwg.mxu0
    %565 = vst [vmem:[#allocation2] sm:$0xff] %v563
    // Predicated region
    $region18: #{tpu_custom_call.1} parent=1 // pred_check
      _
    $region19: #{tpu_custom_call.1} parent=1 // pred_check_branch
      %567 = sbr.rel (0) target = $region21
    $region20: #{tpu_custom_call.1} parent=1 // pred_region
      %569 = vsyncadd [#allocation3], 0
      %s571 = sshll.u32 [#allocation2], 4
      %s572 = int_to_ptr.vmem [resolvable:$true] %s571
      %s573 = sshll.u32 %s4, 4
      %s574 = int_to_ptr.hbm [resolvable:$true] %s573
      %576 = dma.vmem_to_hbm [thread:$0]  %s572, 128, %s574, [#allocation3]
    $region21: #{tpu_custom_call.1} parent=1 // pred_fallthru
      _
    // Predicated region
    $region22: #{tpu_custom_call.1} parent=1 // pred_check
      _
    $region23: #{tpu_custom_call.1} parent=1 // pred_check_branch
      %578 = sbr.rel (0) target = $region25
    $region24: #{tpu_custom_call.1} parent=1 // pred_region
      %580 = dma.done [#allocation3], 128
    $region25: #{tpu_custom_call.1} parent=1 // pred_fallthru
      _
    %581 = vsyncpa [#allocation3], 1

</llo_original>
